<compile_context>
chip_gen: v7x
topology: tpu7x:2x2x1
jax: 0.10.0
libtpu: 0.0.40
codegen_flags: <defaults>
</compile_context>

<pallas_src>
import functools

import jax
import jax.numpy as jnp
from jax.experimental import pallas as pl
from jax.experimental.pallas import tpu as pltpu

BN_EPS = 1e-5


def _encoder_kernel(x_ref, m_ref, w1_ref, t1_ref, w2_ref, t2_ref, o_ref, *,
                    Wp, L):
    """Refs:
      x_ref : (C_in, L)        zero-padded input tile; channels on sublanes,
                               (image, padded-spatial) flattened on lanes.
      m_ref : (1, L)           interior mask: 1 on real pixels, 0 on halo/pad.
      w1_ref: (C_out, 9*C_in)  bf16 conv1 weights, BN1 scale folded in.
      t1_ref: (C_out, 1)       f32 conv1 bias + BN1 shift.
      w2_ref: (C_out, 9*C_out) bf16 conv2 weights, BN2 scale folded in.
      t2_ref: (C_out, 1)       f32 conv2 bias + BN2 shift.
      o_ref : (C_out, L)
    """

    def conv3x3(inp, w_ref):
        # inp: (C_k, L) f32 with exact zeros in every halo / padding lane.
        # Stack the 9 shifted taps along the contraction axis -> one wide-K
        # MXU matmul.  Real pixels' neighbours always land inside their own
        # padded image, so roll wrap-around never contaminates real outputs.
        taps = []
        for ky in range(3):
            for kx in range(3):
                off = (ky - 1) * Wp + (kx - 1)
                taps.append(inp if off == 0
                            else pltpu.roll(inp, (-off) % L, axis=1))
        stacked = jnp.concatenate(taps, axis=0).astype(jnp.bfloat16)
        return jnp.dot(w_ref[...], stacked,
                       preferred_element_type=jnp.float32)

    x = x_ref[...]
    a1 = conv3x3(x, w1_ref)                                   # (C_out, L) f32
    # shift + ReLU, then re-zero halo lanes so stage 2 sees proper conv padding
    h1 = jnp.maximum(a1 + t1_ref[...], 0.0) * m_ref[...]
    a2 = conv3x3(h1, w2_ref)
    o_ref[...] = jnp.maximum(a2 + t2_ref[...], 0.0).astype(o_ref.dtype)


@functools.partial(jax.jit, static_argnames=("images_per_tile",))
def encoder_forward(x, params, *, images_per_tile=None):
    """x: (N, in_c, H, W) float32 NCHW. Eval-mode BN. Returns (N, out_c, H, W)."""
    (w1, b1, g1, be1, rm1, rv1, w2, b2, g2, be2, rm2, rv2) = params
    N, C_in, H, W = x.shape
    C_out = w1.shape[0]
    Hp, Wp = H + 2, W + 2                         # conv halo of 1 each side
    hwp = Hp * Wp
    hwp_pad = -(-hwp // 128) * 128                # lane-dense per-image stride

    # Fold conv bias + eval BatchNorm:  y = conv(x, w*s) + ((b - mean)*s + beta)
    def fold(w, b, gamma, beta, mean, var):
        s = gamma * jax.lax.rsqrt(var + BN_EPS)
        return w * s[:, None, None, None], ((b - mean) * s + beta).reshape(-1, 1)

    w1s, t1 = fold(w1, b1, g1, be1, rm1, rv1)
    w2s, t2 = fold(w2, b2, g2, be2, rm2, rv2)

    # (C_out, C_k, 3, 3) -> (C_out, 9*C_k), column index t*C_k + c with
    # t = ky*3 + kx, matching the in-kernel tap stacking order.  bf16 for MXU.
    def flat_w(w):
        co, ck = w.shape[0], w.shape[1]
        return jnp.transpose(w, (0, 2, 3, 1)).reshape(co, 9 * ck).astype(
            jnp.bfloat16)

    w1f, w2f = flat_w(w1s), flat_w(w2s)

    # Zero-pad each image spatially (conv padding) and to the lane-dense
    # stride, then put channels on sublanes and (image, spatial) on lanes.
    xp = jnp.pad(x, ((0, 0), (0, 0), (1, 1), (1, 1))).reshape(N, C_in, hwp)
    xp = jnp.pad(xp, ((0, 0), (0, 0), (0, hwp_pad - hwp)))
    x2 = jnp.transpose(xp, (1, 0, 2)).reshape(C_in, N * hwp_pad)

    # Interior mask: 1 on real pixels, 0 on halo / lane-padding positions.
    idx = jnp.arange(hwp_pad, dtype=jnp.int32)
    rows, cols = idx // Wp, idx % Wp
    interior = ((rows >= 1) & (rows <= H) & (cols >= 1) & (cols <= W)
                ).astype(jnp.float32)
    mask = jnp.tile(interior, (N,)).reshape(1, N * hwp_pad)

    # --- tile (images-per-step) selection ------------------------------------
    bytes_per_img = hwp_pad * (
        4 * (2 * C_in + 2 * C_out + 2)        # double-buffered in/out + mask
        + 6 * 9 * (C_in + C_out)              # stacked taps (f32 + bf16 copy)
        + 4 * 3 * C_out)                      # h1 / accumulator headroom
    if images_per_tile is None:
        target_lanes = 8192                   # amortize per-grid-step overhead
        ipt = max(1, target_lanes // hwp_pad)
        ipt = max(1, min(ipt, (20 * 1024 * 1024) // max(1, bytes_per_img)))
    else:
        ipt = max(1, images_per_tile)
    ipt = min(ipt, N)
    if N >= 2:                                # keep >=2 grid steps (v7x 2 TCs)
        ipt = min(ipt, (N + 1) // 2)
    while N % ipt:                            # no batch padding / wasted work
        ipt -= 1
    L = ipt * hwp_pad

    est = ipt * bytes_per_img + 4 * (w1f.size + w2f.size) + (1 << 16)
    vmem_limit = int(min(48 * 1024 * 1024, max(32 * 1024 * 1024, 2 * est)))

    kernel = functools.partial(_encoder_kernel, Wp=Wp, L=L)

    out2 = pl.pallas_call(
        kernel,
        out_shape=jax.ShapeDtypeStruct((C_out, N * hwp_pad), x.dtype),
        grid_spec=pltpu.PrefetchScalarGridSpec(
            num_scalar_prefetch=0,
            grid=(N // ipt,),
            in_specs=[
                pl.BlockSpec((C_in, L), lambda i: (0, i)),           # x tile
                pl.BlockSpec((1, L), lambda i: (0, i)),              # mask
                pl.BlockSpec((C_out, 9 * C_in), lambda i: (0, 0)),   # w1
                pl.BlockSpec((C_out, 1), lambda i: (0, 0)),          # shift1
                pl.BlockSpec((C_out, 9 * C_out), lambda i: (0, 0)),  # w2
                pl.BlockSpec((C_out, 1), lambda i: (0, 0)),          # shift2
            ],
            out_specs=pl.BlockSpec((C_out, L), lambda i: (0, i)),
        ),
        compiler_params=pltpu.CompilerParams(
            dimension_semantics=("parallel",),
            vmem_limit_bytes=vmem_limit),
    )(x2, mask, w1f, t1, w2f, t2)

    # Strip lane + spatial padding:  (C_out, N*hwp_pad) -> (N, C_out, H, W)
    out = out2.reshape(C_out, N, hwp_pad)[:, :, :hwp]
    out = out.reshape(C_out, N, Hp, Wp)[:, :, 1:H + 1, 1:W + 1]
    return jnp.transpose(out, (1, 0, 2, 3))


def make_params(key, in_c, out_c):
    """Deterministic synthetic parameters for the two Conv+BN stages."""
    ks = jax.random.split(key, 12)
    w1 = 0.05 * jax.random.normal(ks[0], (out_c, in_c, 3, 3), jnp.float32)
    b1 = 0.1 * jax.random.normal(ks[1], (out_c,), jnp.float32)
    g1 = jax.random.uniform(ks[2], (out_c,), jnp.float32, 0.5, 1.5)
    be1 = 0.1 * jax.random.normal(ks[3], (out_c,), jnp.float32)
    rm1 = 0.1 * jax.random.normal(ks[4], (out_c,), jnp.float32)
    rv1 = jax.random.uniform(ks[5], (out_c,), jnp.float32, 0.5, 1.5)
    w2 = 0.05 * jax.random.normal(ks[6], (out_c, out_c, 3, 3), jnp.float32)
    b2 = 0.1 * jax.random.normal(ks[7], (out_c,), jnp.float32)
    g2 = jax.random.uniform(ks[8], (out_c,), jnp.float32, 0.5, 1.5)
    be2 = 0.1 * jax.random.normal(ks[9], (out_c,), jnp.float32)
    rm2 = 0.1 * jax.random.normal(ks[10], (out_c,), jnp.float32)
    rv2 = jax.random.uniform(ks[11], (out_c,), jnp.float32, 0.5, 1.5)
    return (w1, b1, g1, be1, rm1, rv1, w2, b2, g2, be2, rm2, rv2)


def encoder_ref(x, params):
    """Pure-JAX reference: Conv3x3(pad=1)+bias -> BatchNorm(eval) -> ReLU, x2."""
    (w1, b1, g1, be1, rm1, rv1, w2, b2, g2, be2, rm2, rv2) = params

    def stage(x, w, b, gamma, beta, mean, var):
        y = jax.lax.conv_general_dilated(
            x, w, window_strides=(1, 1), padding=((1, 1), (1, 1)),
            dimension_numbers=("NCHW", "OIHW", "NCHW"))
        y = y + b[None, :, None, None]
        y = (y - mean[None, :, None, None]) * jax.lax.rsqrt(
            var[None, :, None, None] + BN_EPS)
        y = y * gamma[None, :, None, None] + beta[None, :, None, None]
        return jnp.maximum(y, 0.0)

    h = stage(x, w1, b1, g1, be1, rm1, rv1)
    return stage(h, w2, b2, g2, be2, rm2, rv2)


if __name__ == "__main__":
    key = jax.random.PRNGKey(0)
    k_x, k_p = jax.random.split(key)

    N, in_c, out_c, H, W = 2, 4, 8, 16, 16
    x = jax.random.normal(k_x, (N, in_c, H, W), jnp.float32)
    params = make_params(k_p, in_c, out_c)

    out = jax.block_until_ready(encoder_forward(x, params))

    ref = encoder_ref(x, params)
    assert out.shape == (N, out_c, H, W)
    assert jnp.allclose(out, ref, atol=2e-2, rtol=2e-2), "mismatch vs reference"

    print("KERNEL_OK")
</pallas_src>

<mosaic_0001>
module attributes {stable_mosaic.version = 11 : i64} {
  func.func @_encoder_kernel(%arg0: i32, %arg1: memref<4x384xf32, #tpu.memory_space<vmem>>, %arg2: memref<1x384xf32, #tpu.memory_space<vmem>>, %arg3: memref<8x36xbf16, #tpu.memory_space<vmem>>, %arg4: memref<8x1xf32, #tpu.memory_space<vmem>>, %arg5: memref<8x72xbf16, #tpu.memory_space<vmem>>, %arg6: memref<8x1xf32, #tpu.memory_space<vmem>>, %arg7: memref<8x384xf32, #tpu.memory_space<vmem>>) attributes {dimension_semantics = [#tpu.dimension_semantics<parallel>], iteration_bounds = array<i64: 2>, scalar_prefetch = 0 : i64, scratch_operands = 0 : i64, tpu.core_type = #tpu.core_type<tc>, window_params = [{transform_indices = @transform_0, window_bounds = array<i64: 4, 384>}, {transform_indices = @transform_1, window_bounds = array<i64: 1, 384>}, {pipeline_mode = #tpu.pipeline_mode<synchronous>, transform_indices = @transform_2, window_bounds = array<i64: 8, 36>}, {pipeline_mode = #tpu.pipeline_mode<synchronous>, transform_indices = @transform_3, window_bounds = array<i64: 8, 1>}, {pipeline_mode = #tpu.pipeline_mode<synchronous>, transform_indices = @transform_4, window_bounds = array<i64: 8, 72>}, {pipeline_mode = #tpu.pipeline_mode<synchronous>, transform_indices = @transform_5, window_bounds = array<i64: 8, 1>}, {transform_indices = @transform_6, window_bounds = array<i64: 8, 384>}]} {
    %c0 = arith.constant 0 : index
    %c0_0 = arith.constant 0 : index
    %0 = vector.load %arg1[%c0, %c0_0] : memref<4x384xf32, #tpu.memory_space<vmem>>, vector<4x384xf32>
    %c19_i32 = arith.constant 19 : i32
    %1 = tpu.dynamic_rotate %0 by %c19_i32 dim 1 : vector<4x384xf32>, i32 -> vector<4x384xf32>
    %c18_i32 = arith.constant 18 : i32
    %2 = tpu.dynamic_rotate %0 by %c18_i32 dim 1 : vector<4x384xf32>, i32 -> vector<4x384xf32>
    %c17_i32 = arith.constant 17 : i32
    %3 = tpu.dynamic_rotate %0 by %c17_i32 dim 1 : vector<4x384xf32>, i32 -> vector<4x384xf32>
    %c1_i32 = arith.constant 1 : i32
    %4 = tpu.dynamic_rotate %0 by %c1_i32 dim 1 : vector<4x384xf32>, i32 -> vector<4x384xf32>
    %c383_i32 = arith.constant 383 : i32
    %5 = tpu.dynamic_rotate %0 by %c383_i32 dim 1 : vector<4x384xf32>, i32 -> vector<4x384xf32>
    %c367_i32 = arith.constant 367 : i32
    %6 = tpu.dynamic_rotate %0 by %c367_i32 dim 1 : vector<4x384xf32>, i32 -> vector<4x384xf32>
    %c366_i32 = arith.constant 366 : i32
    %7 = tpu.dynamic_rotate %0 by %c366_i32 dim 1 : vector<4x384xf32>, i32 -> vector<4x384xf32>
    %c365_i32 = arith.constant 365 : i32
    %8 = tpu.dynamic_rotate %0 by %c365_i32 dim 1 : vector<4x384xf32>, i32 -> vector<4x384xf32>
    %9 = tpu.concatenate %1, %2, %3, %4, %0, %5, %6, %7, %8 in 0 : vector<4x384xf32>, vector<4x384xf32>, vector<4x384xf32>, vector<4x384xf32>, vector<4x384xf32>, vector<4x384xf32>, vector<4x384xf32>, vector<4x384xf32>, vector<4x384xf32> -> vector<36x384xf32>
    %10 = arith.truncf %9 : vector<36x384xf32> to vector<36x384xbf16>
    %c0_1 = arith.constant 0 : index
    %c0_2 = arith.constant 0 : index
    %11 = vector.load %arg3[%c0_1, %c0_2] : memref<8x36xbf16, #tpu.memory_space<vmem>>, vector<8x36xbf16>
    %cst = arith.constant dense<0.000000e+00> : vector<8x384xf32>
    %12 = tpu.matmul %11, %10, %cst {dimension_numbers = #tpu.dot_dimension_numbers<[1], [0], [0], [1], [0, 0, 1, 1], [], []>} : vector<8x36xbf16>, vector<36x384xbf16>, vector<8x384xf32> -> vector<8x384xf32>
    %c0_3 = arith.constant 0 : index
    %c0_4 = arith.constant 0 : index
    %13 = vector.load %arg4[%c0_3, %c0_4] : memref<8x1xf32, #tpu.memory_space<vmem>>, vector<8x1xf32>
    %14 = vector.broadcast %13 : vector<8x1xf32> to vector<8x384xf32>
    %15 = arith.addf %12, %14 : vector<8x384xf32>
    %cst_5 = arith.constant 0.000000e+00 : f32
    %16 = vector.broadcast %cst_5 : f32 to vector<8x384xf32>
    %17 = arith.maximumf %15, %16 : vector<8x384xf32>
    %c0_6 = arith.constant 0 : index
    %c0_7 = arith.constant 0 : index
    %18 = vector.load %arg2[%c0_6, %c0_7] : memref<1x384xf32, #tpu.memory_space<vmem>>, vector<1x384xf32>
    %19 = vector.broadcast %18 : vector<1x384xf32> to vector<8x384xf32>
    %20 = arith.mulf %17, %19 : vector<8x384xf32>
    %c19_i32_8 = arith.constant 19 : i32
    %21 = tpu.dynamic_rotate %20 by %c19_i32_8 dim 1 : vector<8x384xf32>, i32 -> vector<8x384xf32>
    %c18_i32_9 = arith.constant 18 : i32
    %22 = tpu.dynamic_rotate %20 by %c18_i32_9 dim 1 : vector<8x384xf32>, i32 -> vector<8x384xf32>
    %c17_i32_10 = arith.constant 17 : i32
    %23 = tpu.dynamic_rotate %20 by %c17_i32_10 dim 1 : vector<8x384xf32>, i32 -> vector<8x384xf32>
    %c1_i32_11 = arith.constant 1 : i32
    %24 = tpu.dynamic_rotate %20 by %c1_i32_11 dim 1 : vector<8x384xf32>, i32 -> vector<8x384xf32>
    %c383_i32_12 = arith.constant 383 : i32
    %25 = tpu.dynamic_rotate %20 by %c383_i32_12 dim 1 : vector<8x384xf32>, i32 -> vector<8x384xf32>
    %c367_i32_13 = arith.constant 367 : i32
    %26 = tpu.dynamic_rotate %20 by %c367_i32_13 dim 1 : vector<8x384xf32>, i32 -> vector<8x384xf32>
    %c366_i32_14 = arith.constant 366 : i32
    %27 = tpu.dynamic_rotate %20 by %c366_i32_14 dim 1 : vector<8x384xf32>, i32 -> vector<8x384xf32>
    %c365_i32_15 = arith.constant 365 : i32
    %28 = tpu.dynamic_rotate %20 by %c365_i32_15 dim 1 : vector<8x384xf32>, i32 -> vector<8x384xf32>
    %29 = tpu.concatenate %21, %22, %23, %24, %20, %25, %26, %27, %28 in 0 : vector<8x384xf32>, vector<8x384xf32>, vector<8x384xf32>, vector<8x384xf32>, vector<8x384xf32>, vector<8x384xf32>, vector<8x384xf32>, vector<8x384xf32>, vector<8x384xf32> -> vector<72x384xf32>
    %30 = arith.truncf %29 : vector<72x384xf32> to vector<72x384xbf16>
    %c0_16 = arith.constant 0 : index
    %c0_17 = arith.constant 0 : index
    %31 = vector.load %arg5[%c0_16, %c0_17] : memref<8x72xbf16, #tpu.memory_space<vmem>>, vector<8x72xbf16>
    %cst_18 = arith.constant dense<0.000000e+00> : vector<8x384xf32>
    %32 = tpu.matmul %31, %30, %cst_18 {dimension_numbers = #tpu.dot_dimension_numbers<[1], [0], [0], [1], [0, 0, 1, 1], [], []>} : vector<8x72xbf16>, vector<72x384xbf16>, vector<8x384xf32> -> vector<8x384xf32>
    %c0_19 = arith.constant 0 : index
    %c0_20 = arith.constant 0 : index
    %33 = vector.load %arg6[%c0_19, %c0_20] : memref<8x1xf32, #tpu.memory_space<vmem>>, vector<8x1xf32>
    %34 = vector.broadcast %33 : vector<8x1xf32> to vector<8x384xf32>
    %35 = arith.addf %32, %34 : vector<8x384xf32>
    %cst_21 = arith.constant 0.000000e+00 : f32
    %36 = vector.broadcast %cst_21 : f32 to vector<8x384xf32>
    %37 = arith.maximumf %35, %36 : vector<8x384xf32>
    %c0_22 = arith.constant 0 : index
    %c0_23 = arith.constant 0 : index
    %38 = vector.load %arg7[%c0_22, %c0_23] : memref<8x384xf32, #tpu.memory_space<vmem>>, vector<8x384xf32>
    tpu.vector_store %arg7[%c0_22, %c0_23], %37 {strides = array<i32>} : memref<8x384xf32, #tpu.memory_space<vmem>>, vector<8x384xf32>,
    return
  }
  func.func @transform_0(%arg0: i32) -> (i32, i32) {
    %c0_i32 = arith.constant 0 : i32
    %c0_i32_0 = arith.constant 0 : i32
    return %c0_i32, %arg0 : i32, i32
  }
  func.func @transform_1(%arg0: i32) -> (i32, i32) {
    %c0_i32 = arith.constant 0 : i32
    %c0_i32_0 = arith.constant 0 : i32
    return %c0_i32, %arg0 : i32, i32
  }
  func.func @transform_2(%arg0: i32) -> (i32, i32) {
    %c0_i32 = arith.constant 0 : i32
    %c0_i32_0 = arith.constant 0 : i32
    %c0_i32_1 = arith.constant 0 : i32
    return %c0_i32, %c0_i32_0 : i32, i32
  }
  func.func @transform_3(%arg0: i32) -> (i32, i32) {
    %c0_i32 = arith.constant 0 : i32
    %c0_i32_0 = arith.constant 0 : i32
    %c0_i32_1 = arith.constant 0 : i32
    return %c0_i32, %c0_i32_0 : i32, i32
  }
  func.func @transform_4(%arg0: i32) -> (i32, i32) {
    %c0_i32 = arith.constant 0 : i32
    %c0_i32_0 = arith.constant 0 : i32
    %c0_i32_1 = arith.constant 0 : i32
    return %c0_i32, %c0_i32_0 : i32, i32
  }
  func.func @transform_5(%arg0: i32) -> (i32, i32) {
    %c0_i32 = arith.constant 0 : i32
    %c0_i32_0 = arith.constant 0 : i32
    %c0_i32_1 = arith.constant 0 : i32
    return %c0_i32, %c0_i32_0 : i32, i32
  }
  func.func @transform_6(%arg0: i32) -> (i32, i32) {
    %c0_i32 = arith.constant 0 : i32
    %c0_i32_0 = arith.constant 0 : i32
    return %c0_i32, %arg0 : i32, i32
  }
}

</mosaic_0001>

<llo_original>
// kernel: encoder_forward.1
$region0: #{encoder_forward.1}
  #allocation0 [shape = 'u32[]', space=smem, size = 0x4, offset = 0x4, fixed_abs, tag = 'smem constant byte address 0x4 - core index']
  #allocation1 [shape = 'u32[144,128]{1,0:T(1,128)}', space=vmem, size = 0x12000, scoped, tag = 'internal scratch']
  %s0 = inlined_call_operand.vmem [shape: f32[4,768], index: 0, kind: input, shape index: {}]
  %s1 = inlined_call_operand.vmem [shape: f32[1,768], index: 1, kind: input, shape index: {}]
  %s2 = inlined_call_operand.vmem [shape: bf16[8,36], index: 2, kind: input, shape index: {}]
  %s3 = inlined_call_operand.vmem [shape: f32[8,1], index: 3, kind: input, shape index: {}]
  %s4 = inlined_call_operand.vmem [shape: bf16[8,72], index: 4, kind: input, shape index: {}]
  %s5 = inlined_call_operand.vmem [shape: f32[8,1], index: 5, kind: input, shape index: {}]
  %s6 = inlined_call_operand.vmem [shape: f32[8,768], index: 6, kind: output, shape index: {}]
  %s7 = sld [smem:[#allocation0]]
  $region57: #{encoder_forward.1} parent=0
    _
  %s9 = ssub.s32 1, %s7
  %s10 = scalar_select 0, %s9, %s7
  loop: start=0, step=1, limit=4
  $region2: #{encoder_forward.1} parent=0 // loop_pre_header
    _
  $region3: #{encoder_forward.1} parent=0 // loop_header
    %s12 = sphi 0, %s16
    %p13 = scmp.ge.s32.totalorder %s12, 4
    %s22 = sphi 0, %s24
    %s25 = sphi 0, %s22
    %s26 = sphi 0, %s25
    %s42 = sphi 0, %s26
    %s48 = sphi 0, %s50
    %s51 = sphi 0, %s48
    %s52 = sphi 0, %s51
    %s68 = sphi 0, %s52
    %s72 = sphi 0, %s72
    %s74 = sphi 0, %s72
    %s75 = sphi 0, %s74
    %s89 = sphi 0, %s75
    %s93 = sphi 0, %s93
    %s95 = sphi 0, %s93
    %s96 = sphi 0, %s95
    %s110 = sphi 0, %s96
    %s114 = sphi 0, %s114
    %s116 = sphi 0, %s114
    %s117 = sphi 0, %s116
    %s131 = sphi 0, %s117
    %s135 = sphi 0, %s135
    %s137 = sphi 0, %s135
    %s138 = sphi 0, %s137
    %s152 = sphi 0, %s138
    %s158 = sphi 0, %s160
    %s161 = sphi 0, %s158
    %s162 = sphi 0, %s161
    %s178 = sphi 0, %s162
  $region4: #{encoder_forward.1} parent=0 // loop_header_branch
    %15 = sbr.rel (%p13) target = $region8
  $region5: #{encoder_forward.1} parent=0 // loop_body
    %s17 = ssub.s32 %s12, 1
    %s18 = ssub.s32 %s12, 2
    %s19 = sadd.s32 %s12, 1
    %s20 = ssub.s32 %s12, %s19
    %p21 = scmp.eq.s32.totalorder %s20, 0
    %s23 = sadd.s32 %s22, 1
    %s24 = scalar_select %p21, %s22, %s23
    %p27 = pneg %p21
    %p28 = scmp.eq.s32.totalorder %s12, 1
    %p29 = por %p27, %p28
    %p30 = scmp.ne.s32.totalorder %s22, %s25
    %p31 = scmp.eq.s32.totalorder %s12, 0
    %p32 = por %p30, %p31
    %p33 = scmp.ne.s32.totalorder %s22, %s25
    %p34 = scmp.eq.s32.totalorder %s17, 1
    %p35 = por %p33, %p34
    %p36 = scmp.ne.s32.totalorder %s25, %s26
    %p37 = scmp.eq.s32.totalorder %s17, 0
    %p38 = por %p36, %p37
    %p39 = scmp.ne.s32.totalorder %s25, %s26
    %p40 = scmp.eq.s32.totalorder %s18, 1
    %p41 = por %p39, %p40
    %p43 = scmp.ne.s32.totalorder %s26, %s42
    %p44 = scmp.eq.s32.totalorder %s18, 0
    %p45 = por %p43, %p44
    %s46 = ssub.s32 %s12, %s19
    %p47 = scmp.eq.s32.totalorder %s46, 0
    %s49 = sadd.s32 %s48, 1
    %s50 = scalar_select %p47, %s48, %s49
    %p53 = pneg %p47
    %p54 = scmp.eq.s32.totalorder %s12, 1
    %p55 = por %p53, %p54
    %p56 = scmp.ne.s32.totalorder %s48, %s51
    %p57 = scmp.eq.s32.totalorder %s12, 0
    %p58 = por %p56, %p57
    %p59 = scmp.ne.s32.totalorder %s48, %s51
    %p60 = scmp.eq.s32.totalorder %s17, 1
    %p61 = por %p59, %p60
    %p62 = scmp.ne.s32.totalorder %s51, %s52
    %p63 = scmp.eq.s32.totalorder %s17, 0
    %p64 = por %p62, %p63
    %p65 = scmp.ne.s32.totalorder %s51, %s52
    %p66 = scmp.eq.s32.totalorder %s18, 1
    %p67 = por %p65, %p66
    %p69 = scmp.ne.s32.totalorder %s52, %s68
    %p70 = scmp.eq.s32.totalorder %s18, 0
    %p71 = por %p69, %p70
    %s73 = sadd.s32 %s72, 1
    %p76 = scmp.eq.s32.totalorder %s12, 1
    %p77 = scmp.ne.s32.totalorder %s72, %s74
    %p78 = scmp.eq.s32.totalorder %s12, 0
    %p79 = por %p77, %p78
    %p80 = scmp.ne.s32.totalorder %s72, %s74
    %p81 = scmp.eq.s32.totalorder %s17, 1
    %p82 = por %p80, %p81
    %p83 = scmp.ne.s32.totalorder %s74, %s75
    %p84 = scmp.eq.s32.totalorder %s17, 0
    %p85 = por %p83, %p84
    %p86 = scmp.ne.s32.totalorder %s74, %s75
    %p87 = scmp.eq.s32.totalorder %s18, 1
    %p88 = por %p86, %p87
    %p90 = scmp.ne.s32.totalorder %s75, %s89
    %p91 = scmp.eq.s32.totalorder %s18, 0
    %p92 = por %p90, %p91
    %s94 = sadd.s32 %s93, 1
    %p97 = scmp.eq.s32.totalorder %s12, 1
    %p98 = scmp.ne.s32.totalorder %s93, %s95
    %p99 = scmp.eq.s32.totalorder %s12, 0
    %p100 = por %p98, %p99
    %p101 = scmp.ne.s32.totalorder %s93, %s95
    %p102 = scmp.eq.s32.totalorder %s17, 1
    %p103 = por %p101, %p102
    %p104 = scmp.ne.s32.totalorder %s95, %s96
    %p105 = scmp.eq.s32.totalorder %s17, 0
    %p106 = por %p104, %p105
    %p107 = scmp.ne.s32.totalorder %s95, %s96
    %p108 = scmp.eq.s32.totalorder %s18, 1
    %p109 = por %p107, %p108
    %p111 = scmp.ne.s32.totalorder %s96, %s110
    %p112 = scmp.eq.s32.totalorder %s18, 0
    %p113 = por %p111, %p112
    %s115 = sadd.s32 %s114, 1
    %p118 = scmp.eq.s32.totalorder %s12, 1
    %p119 = scmp.ne.s32.totalorder %s114, %s116
    %p120 = scmp.eq.s32.totalorder %s12, 0
    %p121 = por %p119, %p120
    %p122 = scmp.ne.s32.totalorder %s114, %s116
    %p123 = scmp.eq.s32.totalorder %s17, 1
    %p124 = por %p122, %p123
    %p125 = scmp.ne.s32.totalorder %s116, %s117
    %p126 = scmp.eq.s32.totalorder %s17, 0
    %p127 = por %p125, %p126
    %p128 = scmp.ne.s32.totalorder %s116, %s117
    %p129 = scmp.eq.s32.totalorder %s18, 1
    %p130 = por %p128, %p129
    %p132 = scmp.ne.s32.totalorder %s117, %s131
    %p133 = scmp.eq.s32.totalorder %s18, 0
    %p134 = por %p132, %p133
    %s136 = sadd.s32 %s135, 1
    %p139 = scmp.eq.s32.totalorder %s12, 1
    %p140 = scmp.ne.s32.totalorder %s135, %s137
    %p141 = scmp.eq.s32.totalorder %s12, 0
    %p142 = por %p140, %p141
    %p143 = scmp.ne.s32.totalorder %s135, %s137
    %p144 = scmp.eq.s32.totalorder %s17, 1
    %p145 = por %p143, %p144
    %p146 = scmp.ne.s32.totalorder %s137, %s138
    %p147 = scmp.eq.s32.totalorder %s17, 0
    %p148 = por %p146, %p147
    %p149 = scmp.ne.s32.totalorder %s137, %s138
    %p150 = scmp.eq.s32.totalorder %s18, 1
    %p151 = por %p149, %p150
    %p153 = scmp.ne.s32.totalorder %s138, %s152
    %p154 = scmp.eq.s32.totalorder %s18, 0
    %p155 = por %p153, %p154
    %s156 = ssub.s32 %s12, %s19
    %p157 = scmp.eq.s32.totalorder %s156, 0
    %s159 = sadd.s32 %s158, 1
    %s160 = scalar_select %p157, %s158, %s159
    %p163 = pneg %p157
    %p164 = scmp.eq.s32.totalorder %s12, 1
    %p165 = por %p163, %p164
    %p166 = scmp.ne.s32.totalorder %s158, %s161
    %p167 = scmp.eq.s32.totalorder %s12, 0
    %p168 = por %p166, %p167
    %p169 = scmp.ne.s32.totalorder %s158, %s161
    %p170 = scmp.eq.s32.totalorder %s17, 1
    %p171 = por %p169, %p170
    %p172 = scmp.ne.s32.totalorder %s161, %s162
    %p173 = scmp.eq.s32.totalorder %s17, 0
    %p174 = por %p172, %p173
    %p175 = scmp.ne.s32.totalorder %s161, %s162
    %p176 = scmp.eq.s32.totalorder %s18, 1
    %p177 = por %p175, %p176
    %p179 = scmp.ne.s32.totalorder %s162, %s178
    %p180 = scmp.eq.s32.totalorder %s18, 0
    %p181 = por %p179, %p180
    %p182 = scmp.le.s32.totalorder 1, %s12
    %p183 = scmp.lt.s32.totalorder %s12, 3
    %p184 = pnand %p182, %p183
    %p185 = pneg %p184
    // Predicated region
    $region9: #{encoder_forward.1} parent=5 // pred_check
      _
    $region10: #{encoder_forward.1} parent=5 // pred_check_branch
      %187 = sbr.rel (%p184) target = $region12
    $region11: #{encoder_forward.1} parent=5 // pred_region
      %s188 = ssub.s32 %s12, 1
      // Predicated region
      $region13: #{encoder_forward.1} parent=11 // pred_check
        %p189 = pneg %p85
      $region14: #{encoder_forward.1} parent=11 // pred_check_branch
        %191 = sbr.rel (%p189) target = $region16
      $region15: #{encoder_forward.1} parent=11 // pred_region
        _
      $region16: #{encoder_forward.1} parent=11 // pred_fallthru
        _
      // Predicated region
      $region17: #{encoder_forward.1} parent=11 // pred_check
        %p192 = pneg %p106
      $region18: #{encoder_forward.1} parent=11 // pred_check_branch
        %194 = sbr.rel (%p192) target = $region20
      $region19: #{encoder_forward.1} parent=11 // pred_region
        _
      $region20: #{encoder_forward.1} parent=11 // pred_fallthru
        _
      // Predicated region
      $region21: #{encoder_forward.1} parent=11 // pred_check
        %p195 = pneg %p127
      $region22: #{encoder_forward.1} parent=11 // pred_check_branch
        %197 = sbr.rel (%p195) target = $region24
      $region23: #{encoder_forward.1} parent=11 // pred_region
        _
      $region24: #{encoder_forward.1} parent=11 // pred_fallthru
        _
      // Predicated region
      $region25: #{encoder_forward.1} parent=11 // pred_check
        %p198 = pneg %p148
      $region26: #{encoder_forward.1} parent=11 // pred_check_branch
        %200 = sbr.rel (%p198) target = $region28
      $region27: #{encoder_forward.1} parent=11 // pred_region
        _
      $region28: #{encoder_forward.1} parent=11 // pred_fallthru
        _
    $region12: #{encoder_forward.1} parent=5 // pred_fallthru
      _
    %p201 = scmp.lt.s32.totalorder %s12, 2
    // Predicated region
    $region29: #{encoder_forward.1} parent=5 // pred_check
      %p202 = pneg %p201
    $region30: #{encoder_forward.1} parent=5 // pred_check_branch
      %204 = sbr.rel (%p202) target = $region32
    $region31: #{encoder_forward.1} parent=5 // pred_region
      // Predicated region
      $region33: #{encoder_forward.1} parent=31 // pred_check
        %p205 = pneg %p32
      $region34: #{encoder_forward.1} parent=31 // pred_check_branch
        %207 = sbr.rel (%p205) target = $region36
      $region35: #{encoder_forward.1} parent=31 // pred_region
        %s208 = smul.u32 3, %s12
        %p209 = scmp.lt.s32.totalorder %s208, 5
        %s210 = scalar_select %p209, %s208, 5
        %s211 = smul.addr %s210, 4
        %s212 = scalar_lea.vmem %s0, %s211
        %s213 = smul.u32 3, %s12
      $region36: #{encoder_forward.1} parent=31 // pred_fallthru
        _
      // Predicated region
      $region37: #{encoder_forward.1} parent=31 // pred_check
        %p214 = pneg %p58
      $region38: #{encoder_forward.1} parent=31 // pred_check_branch
        %216 = sbr.rel (%p214) target = $region40
      $region39: #{encoder_forward.1} parent=31 // pred_region
        %s217 = smul.u32 3, %s12
        %p218 = scmp.lt.s32.totalorder %s217, 5
        %s219 = scalar_select %p218, %s217, 5
        %s220 = scalar_lea.vmem %s1, %s219
        %s221 = smul.u32 3, %s12
      $region40: #{encoder_forward.1} parent=31 // pred_fallthru
        _
    $region32: #{encoder_forward.1} parent=5 // pred_fallthru
      _
    %p222 = scmp.le.s32.totalorder 1, %s12
    %p223 = scmp.lt.s32.totalorder %s12, 3
    %p224 = pnand %p222, %p223
    %p225 = pneg %p224
    // Predicated region
    $region41: #{encoder_forward.1} parent=5 // pred_check
      _
    $region42: #{encoder_forward.1} parent=5 // pred_check_branch
      %227 = sbr.rel (%p224) target = $region44
    $region43: #{encoder_forward.1} parent=5 // pred_region
      %s228 = ssub.s32 %s12, 1
      %s229 = smul.u32 3, %s17
      %p230 = scmp.lt.s32.totalorder %s229, 5
      %s231 = scalar_select %p230, %s229, 5
      %s232 = smul.addr %s231, 4
      %s233 = scalar_lea.vmem %s0, %s232
      %p234 = pneg %p38
      %p235 = pneg %p35
      %s236 = smul.u32 3, %s17
      %p237 = scmp.lt.s32.totalorder %s236, 5
      %s238 = scalar_select %p237, %s236, 5
      %s239 = scalar_lea.vmem %s1, %s238
      %p240 = pneg %p64
      %p241 = pneg %p61
      %p242 = pneg %p85
      %p243 = pneg %p82
      %p244 = pneg %p106
      %p245 = pneg %p103
      %p246 = pneg %p127
      %p247 = pneg %p124
      %p248 = pneg %p148
      %p249 = pneg %p145
      %p250 = pneg %p174
      %p251 = pneg %p171
      %s252 = smul.u32 3, %s17
      %p253 = scmp.lt.s32.totalorder %s252, 5
      %s254 = scalar_select %p253, %s252, 5
      %s255 = smul.addr %s254, 8
      %s256 = scalar_lea.vmem %s6, %s255
      %s257 = smul.u32 3, %s17
      %p258 = scmp.lt.s32.totalorder %s257, 5
      %s259 = scalar_select %p258, %s257, 5
      %s260 = smul.addr %s259, 4
      %s261 = scalar_lea.vmem %s0, %s260
      %s262 = smul.u32 3, %s17
      %s263 = smul.u32 3, %s17
      %p264 = scmp.lt.s32.totalorder %s263, 5
      %s265 = scalar_select %p264, %s263, 5
      %s266 = scalar_lea.vmem %s1, %s265
      %s267 = smul.u32 3, %s17
      %s268 = smul.u32 3, %s17
      %p269 = scmp.lt.s32.totalorder %s268, 5
      %s270 = scalar_select %p269, %s268, 5
      %s271 = smul.addr %s270, 8
      %s272 = scalar_lea.vmem %s6, %s271
      %s273 = smul.u32 3, %s17
      %v275 = vld [vmem:[%s261] sm:$0xff]
      %v276 = vld [vmem:[%s261 + $0x8] sm:$0xf]
      %v278 = vcombine.high %v275, %v275
      %280 = vrot.lane.b32.xlu0 %v275, 19
      %v281 = vpop.permute.xlu0 %280
      %282 = vrot.lane.b32.xlu0 %v278, 19
      %v283 = vpop.permute.xlu0 %282
      %284 = vrot.lane.b32.xlu0 %v276, 19
      %v285 = vpop.permute.xlu0 %284
      %v286 = vlaneseq
      %v287 = vand.u32 %v286, 127
      %vm288 = vcmp.lt.s32.totalorder %v287, 19
      %v289 = vsel %vm288, %v283, %v285
      %v290 = vsel %vm288, %v281, %v283
      %v291 = vsel %vm288, %v285, %v281
      %292 = vrot.lane.b32.xlu0 %v275, 18
      %v293 = vpop.permute.xlu0 %292
      %294 = vrot.lane.b32.xlu0 %v278, 18
      %v295 = vpop.permute.xlu0 %294
      %296 = vrot.lane.b32.xlu0 %v276, 18
      %v297 = vpop.permute.xlu0 %296
      %vm298 = vcmp.lt.s32.totalorder %v287, 18
      %v299 = vsel %vm298, %v295, %v297
      %v300 = vsel %vm298, %v293, %v295
      %v301 = vsel %vm298, %v297, %v293
      %302 = vrot.lane.b32.xlu0 %v275, 17
      %v303 = vpop.permute.xlu0 %302
      %304 = vrot.lane.b32.xlu0 %v278, 17
      %v305 = vpop.permute.xlu0 %304
      %306 = vrot.lane.b32.xlu0 %v276, 17
      %v307 = vpop.permute.xlu0 %306
      %vm308 = vcmp.lt.s32.totalorder %v287, 17
      %v309 = vsel %vm308, %v305, %v307
      %v310 = vsel %vm308, %v303, %v305
      %v311 = vsel %vm308, %v307, %v303
      %312 = vrot.lane.b32.xlu0 %v275, 1
      %v313 = vpop.permute.xlu0 %312
      %314 = vrot.lane.b32.xlu0 %v278, 1
      %v315 = vpop.permute.xlu0 %314
      %316 = vrot.lane.b32.xlu0 %v276, 1
      %v317 = vpop.permute.xlu0 %316
      %vm318 = vcmp.lt.s32.totalorder %v287, 1
      %v319 = vsel %vm318, %v315, %v317
      %v320 = vsel %vm318, %v313, %v315
      %v321 = vsel %vm318, %v317, %v313
      %322 = vrot.lane.b32.xlu0 %v275, 127
      %v323 = vpop.permute.xlu0 %322
      %324 = vrot.lane.b32.xlu0 %v278, 127
      %v325 = vpop.permute.xlu0 %324
      %326 = vrot.lane.b32.xlu0 %v276, 127
      %v327 = vpop.permute.xlu0 %326
      %vm328 = vcmp.lt.s32.totalorder %v287, 127
      %v329 = vsel %vm328, %v325, %v327
      %v330 = vsel %vm328, %v323, %v325
      %v331 = vsel %vm328, %v327, %v323
      %332 = vrot.lane.b32.xlu0 %v275, 111
      %v333 = vpop.permute.xlu0 %332
      %334 = vrot.lane.b32.xlu0 %v278, 111
      %v335 = vpop.permute.xlu0 %334
      %336 = vrot.lane.b32.xlu0 %v276, 111
      %v337 = vpop.permute.xlu0 %336
      %vm338 = vcmp.lt.s32.totalorder %v287, 111
      %v339 = vsel %vm338, %v335, %v337
      %v340 = vsel %vm338, %v333, %v335
      %v341 = vsel %vm338, %v337, %v333
      %342 = vrot.lane.b32.xlu0 %v275, 110
      %v343 = vpop.permute.xlu0 %342
      %344 = vrot.lane.b32.xlu0 %v278, 110
      %v345 = vpop.permute.xlu0 %344
      %346 = vrot.lane.b32.xlu0 %v276, 110
      %v347 = vpop.permute.xlu0 %346
      %vm348 = vcmp.lt.s32.totalorder %v287, 110
      %v349 = vsel %vm348, %v345, %v347
      %v350 = vsel %vm348, %v343, %v345
      %v351 = vsel %vm348, %v347, %v343
      %352 = vrot.lane.b32.xlu0 %v275, 109
      %v353 = vpop.permute.xlu0 %352
      %354 = vrot.lane.b32.xlu0 %v278, 109
      %v355 = vpop.permute.xlu0 %354
      %356 = vrot.lane.b32.xlu0 %v276, 109
      %v357 = vpop.permute.xlu0 %356
      %vm358 = vcmp.lt.s32.totalorder %v287, 109
      %v359 = vsel %vm358, %v355, %v357
      %v360 = vsel %vm358, %v353, %v355
      %v361 = vsel %vm358, %v357, %v353
      %v365 = vrot.slane %v301, 4
      %v366 = vrot.slane %v300, 4
      %v367 = vrot.slane %v299, 4
      %v374 = vrot.slane %v321, 4
      %v375 = vrot.slane %v320, 4
      %v376 = vrot.slane %v319, 4
      %v383 = vrot.slane %v330, 4
      %v384 = vrot.slane %v329, 4
      %v385 = vrot.slane %v331, 4
      %v392 = vrot.slane %v350, 4
      %v393 = vrot.slane %v349, 4
      %v394 = vrot.slane %v351, 4
      %vm398 = vcmask 1043456
      %v399 = vsel %vm398, %v291, %v365
      %v400 = vsel %vm398, %v290, %v366
      %v401 = vsel %vm398, %v289, %v367
      %v402 = vsel %vm398, %v311, %v374
      %v403 = vsel %vm398, %v310, %v375
      %v404 = vsel %vm398, %v309, %v376
      %v405 = vsel %vm398, %v275, %v383
      %v406 = vsel %vm398, %v278, %v384
      %v407 = vsel %vm398, %v276, %v385
      %v408 = vsel %vm398, %v340, %v392
      %v409 = vsel %vm398, %v339, %v393
      %v410 = vsel %vm398, %v341, %v394
      %v411 = vpack.c.bf16 %v402, %v399
      %v412 = vpack.c.bf16 %v403, %v400
      %v413 = vpack.c.bf16 %v404, %v401
      %v414 = vpack.c.bf16 %v408, %v405
      %v415 = vpack.c.bf16 %v409, %v406
      %v416 = vpack.c.bf16 %v410, %v407
      %v417 = vpack.c.bf16 %v360, %v360
      %v418 = vpack.c.bf16 %v359, %v359
      %v419 = vpack.c.bf16 %v361, %v361
      %v420 = vld [vmem:[%s2] sm:$0xf]
      %v421 = vld [vmem:[%s3] sm:$0xff]
      %423 = vset.pattern.permute.xlu0 0
      %424 = vperm.xlu0 %423, %v421
      %v425 = vpop.permute.xlu0 %424
      %vm427 = vcmask 293888
      %v429 = vsel %vm427, %v420, 0
      %vm431 = vcmask 1041408
      %v433 = vsel %vm431, %v417, 0
      %v436 = vsel %vm431, %v418, 0
      %v439 = vsel %vm431, %v419, 0
      %441 = vmatprep.subr.bf16.mxu0 %v412
      %442 = vmatpush1.bf16.msra.mxu0 %v411
      %443 = vmatprep.subr.bf16.mxu0 %v415
      %444 = vmatpush1.bf16.msra.mxu0 %v414
      %445 = vmatprep.subr.bf16.mxu0 %v436
      %446 = vmatpush1.bf16.msra.mxu0 %v433
      %447 = vmatprep.subr.bf16.mxu0 0
      %448 = vmatpush1.bf16.msra.mxu0 0
      %449 = vmatprep.subr.bf16.mxu0 0
      %450 = vmatpush1.bf16.msra.mxu0 0
      %451 = vmatprep.subr.bf16.mxu0 0
      %452 = vmatpush1.bf16.msra.mxu0 0
      %453 = vmatprep.subr.bf16.mxu0 0
      %454 = vmatpush1.bf16.msra.mxu0 0
      %455 = vmatprep.subr.bf16.mxu0 0
      %456 = vmatpush1.bf16.msra.mxu0 0
      %457 = vmatprep.subr.bf16.mxu0 0
      %458 = vmatpush1.bf16.msra.mxu0 0
      %459 = vmatprep.subr.bf16.mxu0 0
      %460 = vmatpush1.bf16.msra.mxu0 0
      %461 = vmatprep.subr.bf16.mxu0 0
      %462 = vmatpush1.bf16.msra.mxu0 0
      %463 = vmatprep.subr.bf16.mxu0 0
      %464 = vmatpush1.bf16.msra.mxu0 0
      %465 = vmatprep.subr.bf16.mxu0 0
      %466 = vmatpush1.bf16.msra.mxu0 0
      %467 = vmatprep.subr.bf16.mxu0 0
      %468 = vmatpush1.bf16.msra.mxu0 0
      %469 = vmatprep.subr.bf16.mxu0 0
      %470 = vmatpush1.bf16.msra.mxu0 0
      %471 = vmatprep.subr.bf16.mxu0 0
      %472 = vmatpush1.bf16.msra.mxu0 0
      %473 = vmatprep.mubr.bf16.mxu0 0
      %474 = vmatmul.mubr.bf16.gmra.mrb[0].mxu0 %v429
      %v475 = vpop.f32.mrb[0].mxu0
      %v476 = vadd.f32 %v425, %v475
      %v477 = vpop.f32.mrb[0].mxu0
      %v478 = vadd.f32 %v425, %v477
      %v479 = vpop.f32.mrb[0].mxu0
      %v480 = vpop.f32.mrb[0].mxu0
      %481 = vdwg.mxu0
      %482 = vmatprep.subr.bf16.mxu0 0
      %483 = vmatpush1.bf16.msra.mxu0 %v413
      %484 = vmatprep.subr.bf16.mxu0 0
      %485 = vmatpush1.bf16.msra.mxu0 %v416
      %486 = vmatprep.subr.bf16.mxu0 0
      %487 = vmatpush1.bf16.msra.mxu0 %v439
      %488 = vmatprep.subr.bf16.mxu0 0
      %489 = vmatpush1.bf16.msra.mxu0 0
      %490 = vmatprep.subr.bf16.mxu0 0
      %491 = vmatpush1.bf16.msra.mxu0 0
      %492 = vmatprep.subr.bf16.mxu0 0
      %493 = vmatpush1.bf16.msra.mxu0 0
      %494 = vmatprep.subr.bf16.mxu0 0
      %495 = vmatpush1.bf16.msra.mxu0 0
      %496 = vmatprep.subr.bf16.mxu0 0
      %497 = vmatpush1.bf16.msra.mxu0 0
      %498 = vmatprep.subr.bf16.mxu0 0
      %499 = vmatpush1.bf16.msra.mxu0 0
      %500 = vmatprep.subr.bf16.mxu0 0
      %501 = vmatpush1.bf16.msra.mxu0 0
      %502 = vmatprep.subr.bf16.mxu0 0
      %503 = vmatpush1.bf16.msra.mxu0 0
      %504 = vmatprep.subr.bf16.mxu0 0
      %505 = vmatpush1.bf16.msra.mxu0 0
      %506 = vmatprep.subr.bf16.mxu0 0
      %507 = vmatpush1.bf16.msra.mxu0 0
      %508 = vmatprep.subr.bf16.mxu0 0
      %509 = vmatpush1.bf16.msra.mxu0 0
      %510 = vmatprep.subr.bf16.mxu0 0
      %511 = vmatpush1.bf16.msra.mxu0 0
      %512 = vmatprep.subr.bf16.mxu0 0
      %513 = vmatpush1.bf16.msra.mxu0 0
      %514 = vmatprep.mubr.bf16.mxu0 0
      %515 = vmatmul.mubr.bf16.gmra.mrb[0].mxu0 %v429
      %v516 = vpop.f32.mrb[0].mxu0
      %v517 = vadd.f32 %v425, %v516
      %v518 = vpop.f32.mrb[0].mxu0
      %v519 = vpop.f32.mrb[0].mxu0
      %v520 = vpop.f32.mrb[0].mxu0
      %521 = vdwg.mxu0
      %v522 = vmax.f32 %v476, 0.0
      %v523 = vmax.f32 %v478, 0.0
      %v524 = vmax.f32 %v517, 0.0
      %v525 = vld [vmem:[%s266] sm:$0x7]
      %v527 = vlaneseq
      %v528 = vshrl.u32 %v527, 7
      %v529 = vsub.s32 0, %v528
      %v530 = vrot.slane %v525, %v529
      %v531 = vlaneseq
      %v532 = vshrl.u32 %v531, 7
      %v533 = vsub.s32 1, %v532
      %v534 = vrot.slane %v525, %v533
      %v535 = vlaneseq
      %v536 = vshrl.u32 %v535, 7
      %v537 = vsub.s32 2, %v536
      %v538 = vrot.slane %v525, %v537
      %v542 = vmul.f32 %v522, %v530
      %v543 = vmul.f32 %v523, %v534
      %v544 = vmul.f32 %v524, %v538
      %545 = vrot.lane.b32.xlu0 %v542, 19
      %v546 = vpop.permute.xlu0 %545
      %547 = vrot.lane.b32.xlu0 %v543, 19
      %v548 = vpop.permute.xlu0 %547
      %549 = vrot.lane.b32.xlu0 %v544, 19
      %v550 = vpop.permute.xlu0 %549
      %v551 = vsel %vm288, %v548, %v550
      %v552 = vsel %vm288, %v546, %v548
      %v553 = vsel %vm288, %v550, %v546
      %554 = vrot.lane.b32.xlu0 %v542, 18
      %v555 = vpop.permute.xlu0 %554
      %556 = vrot.lane.b32.xlu0 %v543, 18
      %v557 = vpop.permute.xlu0 %556
      %558 = vrot.lane.b32.xlu0 %v544, 18
      %v559 = vpop.permute.xlu0 %558
      %v560 = vsel %vm298, %v557, %v559
      %v561 = vsel %vm298, %v555, %v557
      %v562 = vsel %vm298, %v559, %v555
      %563 = vrot.lane.b32.xlu0 %v542, 17
      %v564 = vpop.permute.xlu0 %563
      %565 = vrot.lane.b32.xlu0 %v543, 17
      %v566 = vpop.permute.xlu0 %565
      %567 = vrot.lane.b32.xlu0 %v544, 17
      %v568 = vpop.permute.xlu0 %567
      %v569 = vsel %vm308, %v566, %v568
      %v570 = vsel %vm308, %v564, %v566
      %v571 = vsel %vm308, %v568, %v564
      %572 = vrot.lane.b32.xlu0 %v542, 1
      %v573 = vpop.permute.xlu0 %572
      %574 = vrot.lane.b32.xlu0 %v543, 1
      %v575 = vpop.permute.xlu0 %574
      %576 = vrot.lane.b32.xlu0 %v544, 1
      %v577 = vpop.permute.xlu0 %576
      %v578 = vsel %vm318, %v575, %v577
      %v579 = vsel %vm318, %v573, %v575
      %v580 = vsel %vm318, %v577, %v573
      %581 = vrot.lane.b32.xlu0 %v542, 127
      %v582 = vpop.permute.xlu0 %581
      %583 = vrot.lane.b32.xlu0 %v543, 127
      %v584 = vpop.permute.xlu0 %583
      %585 = vrot.lane.b32.xlu0 %v544, 127
      %v586 = vpop.permute.xlu0 %585
      %v587 = vsel %vm328, %v584, %v586
      %v588 = vsel %vm328, %v582, %v584
      %v589 = vsel %vm328, %v586, %v582
      %590 = vrot.lane.b32.xlu0 %v542, 111
      %v591 = vpop.permute.xlu0 %590
      %592 = vrot.lane.b32.xlu0 %v543, 111
      %v593 = vpop.permute.xlu0 %592
      %594 = vrot.lane.b32.xlu0 %v544, 111
      %v595 = vpop.permute.xlu0 %594
      %v596 = vsel %vm338, %v593, %v595
      %v597 = vsel %vm338, %v591, %v593
      %v598 = vsel %vm338, %v595, %v591
      %599 = vrot.lane.b32.xlu0 %v542, 110
      %v600 = vpop.permute.xlu0 %599
      %601 = vrot.lane.b32.xlu0 %v543, 110
      %v602 = vpop.permute.xlu0 %601
      %603 = vrot.lane.b32.xlu0 %v544, 110
      %v604 = vpop.permute.xlu0 %603
      %v605 = vsel %vm348, %v602, %v604
      %v606 = vsel %vm348, %v600, %v602
      %v607 = vsel %vm348, %v604, %v600
      %608 = vrot.lane.b32.xlu0 %v542, 109
      %v609 = vpop.permute.xlu0 %608
      %610 = vrot.lane.b32.xlu0 %v543, 109
      %v611 = vpop.permute.xlu0 %610
      %612 = vrot.lane.b32.xlu0 %v544, 109
      %v613 = vpop.permute.xlu0 %612
      %v614 = vsel %vm358, %v611, %v613
      %v615 = vsel %vm358, %v609, %v611
      %v616 = vsel %vm358, %v613, %v609
      %v617 = vpack.c.bf16 %v562, %v553
      %v618 = vpack.c.bf16 %v561, %v552
      %v619 = vpack.c.bf16 %v560, %v551
      %v620 = vpack.c.bf16 %v580, %v571
      %v621 = vpack.c.bf16 %v579, %v570
      %v622 = vpack.c.bf16 %v578, %v569
      %v623 = vpack.c.bf16 %v588, %v542
      %v624 = vpack.c.bf16 %v587, %v543
      %v625 = vpack.c.bf16 %v589, %v544
      %v626 = vpack.c.bf16 %v606, %v597
      %v627 = vpack.c.bf16 %v605, %v596
      %v628 = vpack.c.bf16 %v607, %v598
      %v629 = vpack.c.bf16 %v615, %v615
      %v630 = vpack.c.bf16 %v614, %v614
      %v631 = vpack.c.bf16 %v616, %v616
      %v632 = vld [vmem:[%s4] sm:$0xf]
      %v633 = vld [vmem:[%s5] sm:$0xff]
      %635 = vset.pattern.permute.xlu0 0
      %636 = vperm.xlu0 %635, %v633
      %v637 = vpop.permute.xlu0 %636
      %vm639 = vcmask 588800
      %v641 = vsel %vm639, %v632, 0
      %v644 = vsel %vm398, %v629, 0
      %v647 = vsel %vm398, %v630, 0
      %v650 = vsel %vm398, %v631, 0
      %652 = vmatprep.subr.bf16.mxu0 %v618
      %653 = vmatpush1.bf16.msra.mxu0 %v617
      %654 = vmatprep.subr.bf16.mxu0 %v621
      %655 = vmatpush1.bf16.msra.mxu0 %v620
      %656 = vmatprep.subr.bf16.mxu0 %v624
      %657 = vmatpush1.bf16.msra.mxu0 %v623
      %658 = vmatprep.subr.bf16.mxu0 %v627
      %659 = vmatpush1.bf16.msra.mxu0 %v626
      %660 = vmatprep.subr.bf16.mxu0 %v647
      %661 = vmatpush1.bf16.msra.mxu0 %v644
      %662 = vmatprep.subr.bf16.mxu0 0
      %663 = vmatpush1.bf16.msra.mxu0 0
      %664 = vmatprep.subr.bf16.mxu0 0
      %665 = vmatpush1.bf16.msra.mxu0 0
      %666 = vmatprep.subr.bf16.mxu0 0
      %667 = vmatpush1.bf16.msra.mxu0 0
      %668 = vmatprep.subr.bf16.mxu0 0
      %669 = vmatpush1.bf16.msra.mxu0 0
      %670 = vmatprep.subr.bf16.mxu0 0
      %671 = vmatpush1.bf16.msra.mxu0 0
      %672 = vmatprep.subr.bf16.mxu0 0
      %673 = vmatpush1.bf16.msra.mxu0 0
      %674 = vmatprep.subr.bf16.mxu0 0
      %675 = vmatpush1.bf16.msra.mxu0 0
      %676 = vmatprep.subr.bf16.mxu0 0
      %677 = vmatpush1.bf16.msra.mxu0 0
      %678 = vmatprep.subr.bf16.mxu0 0
      %679 = vmatpush1.bf16.msra.mxu0 0
      %680 = vmatprep.subr.bf16.mxu0 0
      %681 = vmatpush1.bf16.msra.mxu0 0
      %682 = vmatprep.subr.bf16.mxu0 0
      %683 = vmatpush1.bf16.msra.mxu0 0
      %684 = vmatprep.mubr.bf16.mxu0 0
      %685 = vmatmul.mubr.bf16.gmra.mrb[0].mxu0 %v641
      %v686 = vpop.f32.mrb[0].mxu0
      %v687 = vadd.f32 %v637, %v686
      %v688 = vpop.f32.mrb[0].mxu0
      %v689 = vadd.f32 %v637, %v688
      %v690 = vpop.f32.mrb[0].mxu0
      %v691 = vpop.f32.mrb[0].mxu0
      %692 = vdwg.mxu0
      %693 = vmatprep.subr.bf16.mxu0 0
      %694 = vmatpush1.bf16.msra.mxu0 %v619
      %695 = vmatprep.subr.bf16.mxu0 0
      %696 = vmatpush1.bf16.msra.mxu0 %v622
      %697 = vmatprep.subr.bf16.mxu0 0
      %698 = vmatpush1.bf16.msra.mxu0 %v625
      %699 = vmatprep.subr.bf16.mxu0 0
      %700 = vmatpush1.bf16.msra.mxu0 %v628
      %701 = vmatprep.subr.bf16.mxu0 0
      %702 = vmatpush1.bf16.msra.mxu0 %v650
      %703 = vmatprep.subr.bf16.mxu0 0
      %704 = vmatpush1.bf16.msra.mxu0 0
      %705 = vmatprep.subr.bf16.mxu0 0
      %706 = vmatpush1.bf16.msra.mxu0 0
      %707 = vmatprep.subr.bf16.mxu0 0
      %708 = vmatpush1.bf16.msra.mxu0 0
      %709 = vmatprep.subr.bf16.mxu0 0
      %710 = vmatpush1.bf16.msra.mxu0 0
      %711 = vmatprep.subr.bf16.mxu0 0
      %712 = vmatpush1.bf16.msra.mxu0 0
      %713 = vmatprep.subr.bf16.mxu0 0
      %714 = vmatpush1.bf16.msra.mxu0 0
      %715 = vmatprep.subr.bf16.mxu0 0
      %716 = vmatpush1.bf16.msra.mxu0 0
      %717 = vmatprep.subr.bf16.mxu0 0
      %718 = vmatpush1.bf16.msra.mxu0 0
      %719 = vmatprep.subr.bf16.mxu0 0
      %720 = vmatpush1.bf16.msra.mxu0 0
      %721 = vmatprep.subr.bf16.mxu0 0
      %722 = vmatpush1.bf16.msra.mxu0 0
      %723 = vmatprep.subr.bf16.mxu0 0
      %724 = vmatpush1.bf16.msra.mxu0 0
      %725 = vmatprep.mubr.bf16.mxu0 0
      %726 = vmatmul.mubr.bf16.gmra.mrb[0].mxu0 %v641
      %v727 = vpop.f32.mrb[0].mxu0
      %v728 = vadd.f32 %v637, %v727
      %v729 = vpop.f32.mrb[0].mxu0
      %v730 = vpop.f32.mrb[0].mxu0
      %v731 = vpop.f32.mrb[0].mxu0
      %732 = vdwg.mxu0
      %v733 = vmax.f32 %v687, 0.0
      %v734 = vmax.f32 %v689, 0.0
      %v735 = vmax.f32 %v728, 0.0
      %736 = vst [vmem:[%s272] sm:$0xff] %v733
      %737 = vst [vmem:[%s272 + $0x8] sm:$0xff] %v734
      %738 = vst [vmem:[%s272 + $0x10] sm:$0xff] %v735
      %s739 = smul.u32 3, %s17
      %p740 = scmp.lt.s32.totalorder %s739, 5
      %s741 = scalar_select %p740, %s739, 5
      %s742 = smul.addr %s741, 8
      %s743 = scalar_lea.vmem %s6, %s742
      // Predicated region
      $region45: #{encoder_forward.1} parent=43 // pred_check
        %p744 = pneg %p171
      $region46: #{encoder_forward.1} parent=43 // pred_check_branch
        %746 = sbr.rel (%p744) target = $region48
      $region47: #{encoder_forward.1} parent=43 // pred_region
        %s747 = smul.u32 3, %s17
      $region48: #{encoder_forward.1} parent=43 // pred_fallthru
        _
    $region44: #{encoder_forward.1} parent=5 // pred_fallthru
      _
    %p748 = scmp.le.s32.totalorder 2, %s12
    // Predicated region
    $region49: #{encoder_forward.1} parent=5 // pred_check
      %p749 = pneg %p748
    $region50: #{encoder_forward.1} parent=5 // pred_check_branch
      %751 = sbr.rel (%p749) target = $region52
    $region51: #{encoder_forward.1} parent=5 // pred_region
      %s752 = ssub.s32 %s12, 2
      // Predicated region
      $region53: #{encoder_forward.1} parent=51 // pred_check
        %p753 = pneg %p177
      $region54: #{encoder_forward.1} parent=51 // pred_check_branch
        %755 = sbr.rel (%p753) target = $region56
      $region55: #{encoder_forward.1} parent=51 // pred_region
        %s756 = smul.u32 3, %s18
        %p757 = scmp.lt.s32.totalorder %s756, 5
        %s758 = scalar_select %p757, %s756, 5
        %s759 = smul.addr %s758, 8
        %s760 = scalar_lea.vmem %s6, %s759
      $region56: #{encoder_forward.1} parent=51 // pred_fallthru
        _
    $region52: #{encoder_forward.1} parent=5 // pred_fallthru
      _
  $region6: #{encoder_forward.1} parent=0 // loop_footer
    %s16 = sadd.s32 1, %s12
  $region7: #{encoder_forward.1} parent=0 // loop_footer_branch
    %11 = sbr.rel target = $region3
  $region8: #{encoder_forward.1} parent=0 // loop_exit
    _

</llo_original>
